<compile_context>
chip_gen: v7x
topology: tpu7x:2x2x1
jax: 0.10.0
libtpu: 0.0.40
codegen_flags: <defaults>
</compile_context>

<pallas_src>
import jax
import jax.numpy as jnp
from jax import lax
from jax.experimental import pallas as pl
from jax.experimental.pallas import tpu as pltpu

NEG_SLOPE = 0.01  # nn.LeakyReLU default negative_slope


# ------------------------ host-side weight preparation -----------------------
def _toeplitz_weight(w_oihw, padding, W):
    """Block-Toeplitz matrix so the stride-1 'same' conv along W becomes a
    plain matmul:  out[h, w*Cout+co] = sum_k col[h, k] * Wt[k, w*Cout+co]
    with          col[h, kh*Wp*Cin + wp*Cin + ci] = xpad[h+kh, wp, ci]."""
    Cout, Cin, KH, KW = w_oihw.shape
    Wp = W + 2 * padding
    wt = jnp.transpose(w_oihw, (2, 1, 3, 0))                  # (KH, Cin, KW, Cout)
    kw = jnp.arange(Wp)[:, None] - jnp.arange(W)[None, :]     # (Wp, W)
    valid = (kw >= 0) & (kw < KW)
    g = wt[:, :, jnp.clip(kw, 0, KW - 1), :]                  # (KH, Cin, Wp, W, Cout)
    g = jnp.where(valid[None, None, :, :, None], g, 0.0)
    g = jnp.transpose(g, (0, 2, 1, 3, 4))                     # (KH, Wp, Cin, W, Cout)
    return g.reshape(KH * Wp * Cin, W * Cout)


# ----------------------------- conv (+pool) kernel ---------------------------
def _make_conv_kernel(*, KH, p, Hb, Cin, W, Cout, fuse_pool):
    WpCin = (W + 2 * p) * Cin

    def build_col(x_ref, xpad_ref, col_ref):
        # In-kernel zero padding + im2col along H only (W taps are folded into
        # the block-Toeplitz weight) -> all slabs keep W*C in the lane dim.
        xpad_ref[...] = jnp.zeros_like(xpad_ref)
        xpad_ref[p:p + Hb, p * Cin:p * Cin + W * Cin] = x_ref[0]
        for kh in range(KH):                       # static unroll, KH in {3, 5}
            col_ref[:, kh * WpCin:(kh + 1) * WpCin] = xpad_ref[kh:kh + Hb, :]

    def mm(a, b_ref):
        return jnp.dot(a, b_ref[...], preferred_element_type=jnp.float32)

    if fuse_pool:
        def kernel(x_ref, we_ref, wo_ref, o_ref, xpad_ref, col_ref):
            build_col(x_ref, xpad_ref, col_ref)
            # even/odd output rows via strided reads, even/odd output columns
            # via pre-split weights -> MaxPool2d(2,2) is a max of 4 matmuls.
            col_e = col_ref[pl.ds(0, Hb // 2, stride=2), :]
            col_o = col_ref[pl.ds(1, Hb // 2, stride=2), :]
            y = jnp.maximum(
                jnp.maximum(mm(col_e, we_ref), mm(col_e, wo_ref)),
                jnp.maximum(mm(col_o, we_ref), mm(col_o, wo_ref)))
            y = jnp.where(y >= 0, y, NEG_SLOPE * y)            # LeakyReLU
            o_ref[0] = y.astype(o_ref.dtype)                   # single dense store
    else:
        def kernel(x_ref, w_ref, o_ref, xpad_ref, col_ref):
            build_col(x_ref, xpad_ref, col_ref)
            y = mm(col_ref[...], w_ref)
            y = jnp.where(y >= 0, y, NEG_SLOPE * y)            # LeakyReLU
            o_ref[0] = y.astype(o_ref.dtype)                   # single dense store

    return kernel


def conv_leaky_pool(x_nhwc, w_oihw, padding, *, nchunks=1, fuse_pool=False):
    """Conv2d(bias=False, stride=1, 'same') + LeakyReLU (+ optional fused
    MaxPool2d(2,2)).  FocalConv halving handled via `nchunks` H-chunks that are
    folded into the grid (each chunk padded/convolved independently)."""
    N, H, W, Cin = x_nhwc.shape
    Cout, Cin2, KH, KW = w_oihw.shape
    assert Cin == Cin2 and KH == KW and KH == 2 * padding + 1   # Plain uses 'same'
    assert H % nchunks == 0, "FocalConv needs H divisible by 2**halving"
    Hb = H // nchunks
    Nb = N * nchunks
    p = padding
    WpCin = (W + 2 * p) * Cin
    K = KH * WpCin

    x2 = x_nhwc.reshape(Nb, Hb, W * Cin)            # free reshape: chunks -> grid

    wt = _toeplitz_weight(w_oihw, p, W)             # (K, W*Cout), host side
    if fuse_pool:
        assert Hb % 2 == 0 and W % 2 == 0
        w3 = wt.reshape(K, W, Cout)
        weights = (w3[:, 0::2, :].reshape(K, (W // 2) * Cout),
                   w3[:, 1::2, :].reshape(K, (W // 2) * Cout))
        Ho, Wo = Hb // 2, W // 2
    else:
        weights = (wt,)
        Ho, Wo = Hb, W
    Ncols = Wo * Cout

    kernel = _make_conv_kernel(KH=KH, p=p, Hb=Hb, Cin=Cin, W=W, Cout=Cout,
                               fuse_pool=fuse_pool)
    out = pl.pallas_call(
        kernel,
        out_shape=jax.ShapeDtypeStruct((Nb, Ho, Ncols), x_nhwc.dtype),
        grid=(Nb,),
        in_specs=[pl.BlockSpec((1, Hb, W * Cin), lambda n: (n, 0, 0))]
                + [pl.BlockSpec(w.shape, lambda n: (0, 0)) for w in weights],
        out_specs=pl.BlockSpec((1, Ho, Ncols), lambda n: (n, 0, 0)),
        scratch_shapes=[pltpu.VMEM((Hb + 2 * p, WpCin), jnp.float32),  # padded slab
                        pltpu.VMEM((Hb, K), jnp.float32)],             # im2col slab
        compiler_params=pltpu.CompilerParams(
            dimension_semantics=("parallel",)),
    )(x2, *weights)

    return out.reshape(N, nchunks * Ho, Wo, Cout)


# ------------------------ standalone MaxPool2d(2,2) fallback -----------------
def _max4_kernel(a_ref, b_ref, c_ref, d_ref, o_ref):
    o_ref[...] = jnp.maximum(jnp.maximum(a_ref[...], b_ref[...]),
                             jnp.maximum(c_ref[...], d_ref[...]))


def maxpool2x2_nhwc(x):
    # Fallback only: whenever 'M' directly follows a conv (the usual case) the
    # pool is fused into that conv's epilogue and this path is never taken.
    N, H, W, C = x.shape
    Ho, Wo = H // 2, W // 2
    parts = [x[:, i::2, j::2, :][:, :Ho, :Wo, :] for i in (0, 1) for j in (0, 1)]
    spec = pl.BlockSpec((1, Ho, Wo, C), lambda n: (n, 0, 0, 0))
    return pl.pallas_call(
        _max4_kernel,
        out_shape=jax.ShapeDtypeStruct((N, Ho, Wo, C), x.dtype),
        grid=(N,),
        in_specs=[spec] * 4,
        out_specs=spec,
        compiler_params=pltpu.CompilerParams(dimension_semantics=("parallel",)),
    )(*parts)


# ------------------------------- Plain backbone ------------------------------
def init_plain(layers_cfg, in_channels, key):
    """Layer descriptors with deterministic weights (Conv2d, bias=False)."""
    layers = []
    in_c = in_channels
    keys = jax.random.split(key, len(layers_cfg))

    def make_conv(cfg, in_c, k, pad, kkey):
        parts = cfg.split('-')
        typ = parts[0]
        if typ not in ('BC', 'FC'):
            raise ValueError('Only support BC or FC, but got {}'.format(typ))
        out_c = int(parts[1])
        halving = int(parts[2]) if typ == 'FC' else 0
        bound = 1.0 / float(in_c * k * k) ** 0.5      # PyTorch conv default init
        w = jax.random.uniform(kkey, (out_c, in_c, k, k), jnp.float32,
                               -bound, bound)
        return {'type': 'conv', 'w': w, 'padding': pad, 'halving': halving}, out_c

    layer, in_c = make_conv(layers_cfg[0], in_c, 5, 2, keys[0])   # k=5, s=1, p=2
    layers.append(layer)
    for i, cfg in enumerate(layers_cfg[1:], start=1):
        if cfg == 'M':
            layers.append({'type': 'pool'})
        else:
            layer, in_c = make_conv(cfg, in_c, 3, 1, keys[i])     # k=3, s=1, p=1
            layers.append(layer)
    return layers


def plain_forward(layers, seqs_nchw):
    x = jnp.transpose(seqs_nchw, (0, 2, 3, 1))       # NCHW -> NHWC
    i, n = 0, len(layers)
    while i < n:
        layer = layers[i]
        if layer['type'] == 'pool':
            x = maxpool2x2_nhwc(x)
            i += 1
            continue
        nchunks = 2 ** layer['halving'] if layer['halving'] > 0 else 1
        H, W = x.shape[1], x.shape[2]
        assert H % nchunks == 0, "FocalConv requires H divisible by 2**halving"
        Hb = H // nchunks
        fuse_pool = (i + 1 < n and layers[i + 1]['type'] == 'pool'
                     and Hb % 2 == 0 and W % 2 == 0)
        x = conv_leaky_pool(x, layer['w'], layer['padding'],
                            nchunks=nchunks, fuse_pool=fuse_pool)
        i += 2 if fuse_pool else 1
    return jnp.transpose(x, (0, 3, 1, 2))            # NHWC -> NCHW


# ------------------------- pure-XLA reference (checking) ---------------------
def _ref_forward(layers, x_nchw):
    def conv(v, w, p):
        return lax.conv_general_dilated(
            v, w, window_strides=(1, 1), padding=((p, p), (p, p)),
            dimension_numbers=('NCHW', 'OIHW', 'NCHW'),
            precision=lax.Precision.HIGHEST)

    def leaky(v):
        return jnp.where(v >= 0, v, NEG_SLOPE * v)

    def pool(v):
        N, C, H, W = v.shape
        v = v[:, :, :H // 2 * 2, :W // 2 * 2]
        return jnp.max(v.reshape(N, C, H // 2, 2, W // 2, 2), axis=(3, 5))

    x = x_nchw
    for layer in layers:
        if layer['type'] == 'pool':
            x = pool(x)
        elif layer['halving'] == 0:
            x = leaky(conv(x, layer['w'], layer['padding']))
        else:
            H = x.shape[2]
            split = H // (2 ** layer['halving'])
            x = jnp.concatenate(
                [leaky(conv(x[:, :, s:s + split], layer['w'], layer['padding']))
                 for s in range(0, H, split)], axis=2)
    return x


if __name__ == "__main__":
    key = jax.random.PRNGKey(0)
    kparam, kx = jax.random.split(key)

    # BC-8 (k5,p2) -> MaxPool(2,2) -> FC-16-1 (k3,p1, halving=1)
    layers_cfg = ["BC-8", "M", "FC-16-1"]
    layers = init_plain(layers_cfg, in_channels=1, key=kparam)

    x = jax.random.normal(kx, (2, 1, 16, 16), dtype=jnp.float32)   # NCHW

    fwd = jax.jit(lambda inp: plain_forward(layers, inp))
    out = jax.block_until_ready(fwd(x))
    assert out.shape == (2, 16, 8, 8), out.shape

    ref = jax.block_until_ready(_ref_forward(layers, x))
    # Loose tolerance: reference conv runs at HIGHEST precision; the kernel's
    # f32 MXU matmuls may use multi-pass bf16 internally.
    assert jnp.allclose(out, ref, atol=2e-2, rtol=2e-2), \
        float(jnp.max(jnp.abs(out - ref)))

    print("KERNEL_OK")
</pallas_src>

<mosaic_0001>
module attributes {stable_mosaic.version = 11 : i64} {
  func.func @kernel(%arg0: i32, %arg1: memref<1x16x16xf32, #tpu.memory_space<vmem>>, %arg2: memref<100x64xf32, #tpu.memory_space<vmem>>, %arg3: memref<100x64xf32, #tpu.memory_space<vmem>>, %arg4: memref<1x8x64xf32, #tpu.memory_space<vmem>>, %arg5: memref<20x20xf32, #tpu.memory_space<vmem>>, %arg6: memref<16x100xf32, #tpu.memory_space<vmem>>) attributes {dimension_semantics = [#tpu.dimension_semantics<parallel>], iteration_bounds = array<i64: 2>, scalar_prefetch = 0 : i64, scratch_operands = 2 : i64, tpu.core_type = #tpu.core_type<tc>, window_params = [{transform_indices = @transform_0, window_bounds = array<i64: 1, 16, 16>}, {pipeline_mode = #tpu.pipeline_mode<synchronous>, transform_indices = @transform_1, window_bounds = array<i64: 100, 64>}, {pipeline_mode = #tpu.pipeline_mode<synchronous>, transform_indices = @transform_2, window_bounds = array<i64: 100, 64>}, {transform_indices = @transform_3, window_bounds = array<i64: 1, 8, 64>}]} {
    %cst = arith.constant 0.000000e+00 : f32
    %0 = vector.broadcast %cst : f32 to vector<20x20xf32>
    %c0 = arith.constant 0 : index
    %c0_0 = arith.constant 0 : index
    %1 = vector.load %arg5[%c0, %c0_0] : memref<20x20xf32, #tpu.memory_space<vmem>>, vector<20x20xf32>
    tpu.vector_store %arg5[%c0, %c0_0], %0 {strides = array<i32>} : memref<20x20xf32, #tpu.memory_space<vmem>>, vector<20x20xf32>,
    %c0_1 = arith.constant 0 : index
    %c0_2 = arith.constant 0 : index
    %c0_3 = arith.constant 0 : index
    %2 = vector.load %arg1[%c0_1, %c0_2, %c0_3] : memref<1x16x16xf32, #tpu.memory_space<vmem>>, vector<1x16x16xf32>
    %3 = vector.shape_cast %2 : vector<1x16x16xf32> to vector<16x16xf32>
    %c2 = arith.constant 2 : index
    %c2_4 = arith.constant 2 : index
    %4 = vector.load %arg5[%c2, %c2_4] : memref<20x20xf32, #tpu.memory_space<vmem>>, vector<16x16xf32>
    tpu.vector_store %arg5[%c2, %c2_4], %3 {strides = array<i32>} : memref<20x20xf32, #tpu.memory_space<vmem>>, vector<16x16xf32>,
    %c0_5 = arith.constant 0 : index
    %c0_6 = arith.constant 0 : index
    %5 = vector.load %arg5[%c0_5, %c0_6] : memref<20x20xf32, #tpu.memory_space<vmem>>, vector<16x20xf32>
    %c0_7 = arith.constant 0 : index
    %c0_8 = arith.constant 0 : index
    %6 = vector.load %arg6[%c0_7, %c0_8] : memref<16x100xf32, #tpu.memory_space<vmem>>, vector<16x20xf32>
    tpu.vector_store %arg6[%c0_7, %c0_8], %5 {strides = array<i32>} : memref<16x100xf32, #tpu.memory_space<vmem>>, vector<16x20xf32>,
    %c1 = arith.constant 1 : index
    %c0_9 = arith.constant 0 : index
    %7 = vector.load %arg5[%c1, %c0_9] : memref<20x20xf32, #tpu.memory_space<vmem>>, vector<16x20xf32>
    %c0_10 = arith.constant 0 : index
    %c20 = arith.constant 20 : index
    %8 = vector.load %arg6[%c0_10, %c20] : memref<16x100xf32, #tpu.memory_space<vmem>>, vector<16x20xf32>
    tpu.vector_store %arg6[%c0_10, %c20], %7 {strides = array<i32>} : memref<16x100xf32, #tpu.memory_space<vmem>>, vector<16x20xf32>,
    %c2_11 = arith.constant 2 : index
    %c0_12 = arith.constant 0 : index
    %9 = vector.load %arg5[%c2_11, %c0_12] : memref<20x20xf32, #tpu.memory_space<vmem>>, vector<16x20xf32>
    %c0_13 = arith.constant 0 : index
    %c40 = arith.constant 40 : index
    %10 = vector.load %arg6[%c0_13, %c40] : memref<16x100xf32, #tpu.memory_space<vmem>>, vector<16x20xf32>
    tpu.vector_store %arg6[%c0_13, %c40], %9 {strides = array<i32>} : memref<16x100xf32, #tpu.memory_space<vmem>>, vector<16x20xf32>,
    %c3 = arith.constant 3 : index
    %c0_14 = arith.constant 0 : index
    %11 = vector.load %arg5[%c3, %c0_14] : memref<20x20xf32, #tpu.memory_space<vmem>>, vector<16x20xf32>
    %c0_15 = arith.constant 0 : index
    %c60 = arith.constant 60 : index
    %12 = vector.load %arg6[%c0_15, %c60] : memref<16x100xf32, #tpu.memory_space<vmem>>, vector<16x20xf32>
    tpu.vector_store %arg6[%c0_15, %c60], %11 {strides = array<i32>} : memref<16x100xf32, #tpu.memory_space<vmem>>, vector<16x20xf32>,
    %c4 = arith.constant 4 : index
    %c0_16 = arith.constant 0 : index
    %13 = vector.load %arg5[%c4, %c0_16] : memref<20x20xf32, #tpu.memory_space<vmem>>, vector<16x20xf32>
    %c0_17 = arith.constant 0 : index
    %c80 = arith.constant 80 : index
    %14 = vector.load %arg6[%c0_17, %c80] : memref<16x100xf32, #tpu.memory_space<vmem>>, vector<16x20xf32>
    tpu.vector_store %arg6[%c0_17, %c80], %13 {strides = array<i32>} : memref<16x100xf32, #tpu.memory_space<vmem>>, vector<16x20xf32>,
    %c0_18 = arith.constant 0 : index
    %c0_19 = arith.constant 0 : index
    %15 = tpu.strided_load %arg6[%c0_18, %c0_19] {strides = array<i32: 2, 1>} : memref<16x100xf32, #tpu.memory_space<vmem>>, vector<8x100xf32>
    %c1_20 = arith.constant 1 : index
    %c0_21 = arith.constant 0 : index
    %16 = tpu.strided_load %arg6[%c1_20, %c0_21] {strides = array<i32: 2, 1>} : memref<16x100xf32, #tpu.memory_space<vmem>>, vector<8x100xf32>
    %c0_22 = arith.constant 0 : index
    %c0_23 = arith.constant 0 : index
    %17 = vector.load %arg2[%c0_22, %c0_23] : memref<100x64xf32, #tpu.memory_space<vmem>>, vector<100x64xf32>
    %cst_24 = arith.constant dense<0.000000e+00> : vector<8x64xf32>
    %18 = tpu.matmul %15, %17, %cst_24 {dimension_numbers = #tpu.dot_dimension_numbers<[1], [0], [0], [1], [0, 0, 1, 1], [], []>} : vector<8x100xf32>, vector<100x64xf32>, vector<8x64xf32> -> vector<8x64xf32>
    %c0_25 = arith.constant 0 : index
    %c0_26 = arith.constant 0 : index
    %19 = vector.load %arg3[%c0_25, %c0_26] : memref<100x64xf32, #tpu.memory_space<vmem>>, vector<100x64xf32>
    %cst_27 = arith.constant dense<0.000000e+00> : vector<8x64xf32>
    %20 = tpu.matmul %15, %19, %cst_27 {dimension_numbers = #tpu.dot_dimension_numbers<[1], [0], [0], [1], [0, 0, 1, 1], [], []>} : vector<8x100xf32>, vector<100x64xf32>, vector<8x64xf32> -> vector<8x64xf32>
    %21 = arith.maximumf %18, %20 : vector<8x64xf32>
    %c0_28 = arith.constant 0 : index
    %c0_29 = arith.constant 0 : index
    %22 = vector.load %arg2[%c0_28, %c0_29] : memref<100x64xf32, #tpu.memory_space<vmem>>, vector<100x64xf32>
    %cst_30 = arith.constant dense<0.000000e+00> : vector<8x64xf32>
    %23 = tpu.matmul %16, %22, %cst_30 {dimension_numbers = #tpu.dot_dimension_numbers<[1], [0], [0], [1], [0, 0, 1, 1], [], []>} : vector<8x100xf32>, vector<100x64xf32>, vector<8x64xf32> -> vector<8x64xf32>
    %c0_31 = arith.constant 0 : index
    %c0_32 = arith.constant 0 : index
    %24 = vector.load %arg3[%c0_31, %c0_32] : memref<100x64xf32, #tpu.memory_space<vmem>>, vector<100x64xf32>
    %cst_33 = arith.constant dense<0.000000e+00> : vector<8x64xf32>
    %25 = tpu.matmul %16, %24, %cst_33 {dimension_numbers = #tpu.dot_dimension_numbers<[1], [0], [0], [1], [0, 0, 1, 1], [], []>} : vector<8x100xf32>, vector<100x64xf32>, vector<8x64xf32> -> vector<8x64xf32>
    %26 = arith.maximumf %23, %25 : vector<8x64xf32>
    %27 = arith.maximumf %21, %26 : vector<8x64xf32>
    %cst_34 = arith.constant 0.000000e+00 : f32
    %28 = vector.broadcast %cst_34 : f32 to vector<8x64xf32>
    %29 = arith.cmpf oge, %27, %28 : vector<8x64xf32>
    %cst_35 = arith.constant 0.00999999977 : f32
    %30 = vector.broadcast %cst_35 : f32 to vector<8x64xf32>
    %31 = arith.mulf %30, %27 : vector<8x64xf32>
    %32 = arith.select %29, %27, %31 : vector<8x64xi1>, vector<8x64xf32>
    %c0_36 = arith.constant 0 : index
    %c0_37 = arith.constant 0 : index
    %c0_38 = arith.constant 0 : index
    %33 = vector.load %arg4[%c0_36, %c0_37, %c0_38] : memref<1x8x64xf32, #tpu.memory_space<vmem>>, vector<1x8x64xf32>
    %34 = vector.shape_cast %33 : vector<1x8x64xf32> to vector<8x64xf32>
    %35 = vector.shape_cast %32 : vector<8x64xf32> to vector<1x8x64xf32>
    tpu.vector_store %arg4[%c0_36, %c0_37, %c0_38], %35 {strides = array<i32>} : memref<1x8x64xf32, #tpu.memory_space<vmem>>, vector<1x8x64xf32>,
    return
  }
  func.func @transform_0(%arg0: i32) -> (i32, i32, i32) {
    %c0_i32 = arith.constant 0 : i32
    %c0_i32_0 = arith.constant 0 : i32
    %c0_i32_1 = arith.constant 0 : i32
    return %arg0, %c0_i32, %c0_i32_0 : i32, i32, i32
  }
  func.func @transform_1(%arg0: i32) -> (i32, i32) {
    %c0_i32 = arith.constant 0 : i32
    %c0_i32_0 = arith.constant 0 : i32
    %c0_i32_1 = arith.constant 0 : i32
    return %c0_i32, %c0_i32_0 : i32, i32
  }
  func.func @transform_2(%arg0: i32) -> (i32, i32) {
    %c0_i32 = arith.constant 0 : i32
    %c0_i32_0 = arith.constant 0 : i32
    %c0_i32_1 = arith.constant 0 : i32
    return %c0_i32, %c0_i32_0 : i32, i32
  }
  func.func @transform_3(%arg0: i32) -> (i32, i32, i32) {
    %c0_i32 = arith.constant 0 : i32
    %c0_i32_0 = arith.constant 0 : i32
    %c0_i32_1 = arith.constant 0 : i32
    return %arg0, %c0_i32, %c0_i32_0 : i32, i32, i32
  }
}

module attributes {stable_mosaic.version = 11 : i64} {
  func.func @kernel(%arg0: i32, %arg1: memref<1x4x64xf32, #tpu.memory_space<vmem>>, %arg2: memref<240x128xf32, #tpu.memory_space<vmem>>, %arg3: memref<1x4x128xf32, #tpu.memory_space<vmem>>, %arg4: memref<6x80xf32, #tpu.memory_space<vmem>>, %arg5: memref<4x240xf32, #tpu.memory_space<vmem>>) attributes {dimension_semantics = [#tpu.dimension_semantics<parallel>], iteration_bounds = array<i64: 4>, scalar_prefetch = 0 : i64, scratch_operands = 2 : i64, tpu.core_type = #tpu.core_type<tc>, window_params = [{transform_indices = @transform_0, window_bounds = array<i64: 1, 4, 64>}, {pipeline_mode = #tpu.pipeline_mode<synchronous>, transform_indices = @transform_1, window_bounds = array<i64: 240, 128>}, {transform_indices = @transform_2, window_bounds = array<i64: 1, 4, 128>}]} {
    %cst = arith.constant 0.000000e+00 : f32
    %0 = vector.broadcast %cst : f32 to vector<6x80xf32>
    %c0 = arith.constant 0 : index
    %c0_0 = arith.constant 0 : index
    %1 = vector.load %arg4[%c0, %c0_0] : memref<6x80xf32, #tpu.memory_space<vmem>>, vector<6x80xf32>
    tpu.vector_store %arg4[%c0, %c0_0], %0 {strides = array<i32>} : memref<6x80xf32, #tpu.memory_space<vmem>>, vector<6x80xf32>,
    %c0_1 = arith.constant 0 : index
    %c0_2 = arith.constant 0 : index
    %c0_3 = arith.constant 0 : index
    %2 = vector.load %arg1[%c0_1, %c0_2, %c0_3] : memref<1x4x64xf32, #tpu.memory_space<vmem>>, vector<1x4x64xf32>
    %3 = vector.shape_cast %2 : vector<1x4x64xf32> to vector<4x64xf32>
    %c1 = arith.constant 1 : index
    %c8 = arith.constant 8 : index
    %4 = vector.load %arg4[%c1, %c8] : memref<6x80xf32, #tpu.memory_space<vmem>>, vector<4x64xf32>
    tpu.vector_store %arg4[%c1, %c8], %3 {strides = array<i32>} : memref<6x80xf32, #tpu.memory_space<vmem>>, vector<4x64xf32>,
    %c0_4 = arith.constant 0 : index
    %c0_5 = arith.constant 0 : index
    %5 = vector.load %arg4[%c0_4, %c0_5] : memref<6x80xf32, #tpu.memory_space<vmem>>, vector<4x80xf32>
    %c0_6 = arith.constant 0 : index
    %c0_7 = arith.constant 0 : index
    %6 = vector.load %arg5[%c0_6, %c0_7] : memref<4x240xf32, #tpu.memory_space<vmem>>, vector<4x80xf32>
    tpu.vector_store %arg5[%c0_6, %c0_7], %5 {strides = array<i32>} : memref<4x240xf32, #tpu.memory_space<vmem>>, vector<4x80xf32>,
    %c1_8 = arith.constant 1 : index
    %c0_9 = arith.constant 0 : index
    %7 = vector.load %arg4[%c1_8, %c0_9] : memref<6x80xf32, #tpu.memory_space<vmem>>, vector<4x80xf32>
    %c0_10 = arith.constant 0 : index
    %c80 = arith.constant 80 : index
    %8 = vector.load %arg5[%c0_10, %c80] : memref<4x240xf32, #tpu.memory_space<vmem>>, vector<4x80xf32>
    tpu.vector_store %arg5[%c0_10, %c80], %7 {strides = array<i32>} : memref<4x240xf32, #tpu.memory_space<vmem>>, vector<4x80xf32>,
    %c2 = arith.constant 2 : index
    %c0_11 = arith.constant 0 : index
    %9 = vector.load %arg4[%c2, %c0_11] : memref<6x80xf32, #tpu.memory_space<vmem>>, vector<4x80xf32>
    %c0_12 = arith.constant 0 : index
    %c160 = arith.constant 160 : index
    %10 = vector.load %arg5[%c0_12, %c160] : memref<4x240xf32, #tpu.memory_space<vmem>>, vector<4x80xf32>
    tpu.vector_store %arg5[%c0_12, %c160], %9 {strides = array<i32>} : memref<4x240xf32, #tpu.memory_space<vmem>>, vector<4x80xf32>,
    %c0_13 = arith.constant 0 : index
    %c0_14 = arith.constant 0 : index
    %11 = vector.load %arg5[%c0_13, %c0_14] : memref<4x240xf32, #tpu.memory_space<vmem>>, vector<4x240xf32>
    %c0_15 = arith.constant 0 : index
    %c0_16 = arith.constant 0 : index
    %12 = vector.load %arg2[%c0_15, %c0_16] : memref<240x128xf32, #tpu.memory_space<vmem>>, vector<240x128xf32>
    %cst_17 = arith.constant dense<0.000000e+00> : vector<4x128xf32>
    %13 = tpu.matmul %11, %12, %cst_17 {dimension_numbers = #tpu.dot_dimension_numbers<[1], [0], [0], [1], [0, 0, 1, 1], [], []>} : vector<4x240xf32>, vector<240x128xf32>, vector<4x128xf32> -> vector<4x128xf32>
    %cst_18 = arith.constant 0.000000e+00 : f32
    %14 = vector.broadcast %cst_18 : f32 to vector<4x128xf32>
    %15 = arith.cmpf oge, %13, %14 : vector<4x128xf32>
    %cst_19 = arith.constant 0.00999999977 : f32
    %16 = vector.broadcast %cst_19 : f32 to vector<4x128xf32>
    %17 = arith.mulf %16, %13 : vector<4x128xf32>
    %18 = arith.select %15, %13, %17 : vector<4x128xi1>, vector<4x128xf32>
    %c0_20 = arith.constant 0 : index
    %c0_21 = arith.constant 0 : index
    %c0_22 = arith.constant 0 : index
    %19 = vector.load %arg3[%c0_20, %c0_21, %c0_22] : memref<1x4x128xf32, #tpu.memory_space<vmem>>, vector<1x4x128xf32>
    %20 = vector.shape_cast %19 : vector<1x4x128xf32> to vector<4x128xf32>
    %21 = vector.shape_cast %18 : vector<4x128xf32> to vector<1x4x128xf32>
    tpu.vector_store %arg3[%c0_20, %c0_21, %c0_22], %21 {strides = array<i32>} : memref<1x4x128xf32, #tpu.memory_space<vmem>>, vector<1x4x128xf32>,
    return
  }
  func.func @transform_0(%arg0: i32) -> (i32, i32, i32) {
    %c0_i32 = arith.constant 0 : i32
    %c0_i32_0 = arith.constant 0 : i32
    %c0_i32_1 = arith.constant 0 : i32
    return %arg0, %c0_i32, %c0_i32_0 : i32, i32, i32
  }
  func.func @transform_1(%arg0: i32) -> (i32, i32) {
    %c0_i32 = arith.constant 0 : i32
    %c0_i32_0 = arith.constant 0 : i32
    %c0_i32_1 = arith.constant 0 : i32
    return %c0_i32, %c0_i32_0 : i32, i32
  }
  func.func @transform_2(%arg0: i32) -> (i32, i32, i32) {
    %c0_i32 = arith.constant 0 : i32
    %c0_i32_0 = arith.constant 0 : i32
    %c0_i32_1 = arith.constant 0 : i32
    return %arg0, %c0_i32, %c0_i32_0 : i32, i32, i32
  }
}

</mosaic_0001>

<llo_original>
// kernel: _lambda_.2
$region0: #{_lambda_.2}
  #allocation0 [shape = 'u32[]', space=smem, size = 0x4, offset = 0x4, fixed_abs, tag = 'smem constant byte address 0x4 - core index']
  #allocation1 [shape = 'u32[144,128]{1,0:T(1,128)}', space=vmem, size = 0x12000, scoped, tag = 'internal scratch']
  #allocation2 [shape = 'f32[20,20]{1,0:T(8,128)}', space=vmem, size = 0x3000, scoped, tag = 'scratch operand']
  #allocation3 [shape = 'f32[16,100]{1,0:T(8,128)}', space=vmem, size = 0x2000, scoped, tag = 'scratch operand']
  %s0 = inlined_call_operand.vmem [shape: f32[2,16,16], index: 0, kind: input, shape index: {}]
  %s1 = inlined_call_operand.vmem [shape: f32[100,64], index: 1, kind: input, shape index: {}]
  %s2 = inlined_call_operand.vmem [shape: f32[100,64], index: 2, kind: input, shape index: {}]
  %s3 = inlined_call_operand.vmem [shape: f32[2,8,64], index: 3, kind: output, shape index: {}]
  %s4 = sld [smem:[#allocation0]]
  $region45: #{_lambda_.2} parent=0
    _
  %s6 = ssub.s32 1, %s4
  %s7 = scalar_select 0, %s6, %s4
  loop: start=0, step=1, limit=4
  $region2: #{_lambda_.2} parent=0 // loop_pre_header
    _
  $region3: #{_lambda_.2} parent=0 // loop_header
    %s9 = sphi 0, %s13
    %p10 = scmp.ge.s32.totalorder %s9, 4
    %s19 = sphi 0, %s21
    %s22 = sphi 0, %s19
    %s23 = sphi 0, %s22
    %s39 = sphi 0, %s23
    %s43 = sphi 0, %s43
    %s45 = sphi 0, %s43
    %s46 = sphi 0, %s45
    %s60 = sphi 0, %s46
    %s64 = sphi 0, %s64
    %s66 = sphi 0, %s64
    %s67 = sphi 0, %s66
    %s81 = sphi 0, %s67
    %s87 = sphi 0, %s89
    %s90 = sphi 0, %s87
    %s91 = sphi 0, %s90
    %s107 = sphi 0, %s91
  $region4: #{_lambda_.2} parent=0 // loop_header_branch
    %12 = sbr.rel (%p10) target = $region8
  $region5: #{_lambda_.2} parent=0 // loop_body
    %s14 = ssub.s32 %s9, 1
    %s15 = ssub.s32 %s9, 2
    %s16 = sadd.s32 %s9, 1
    %s17 = ssub.s32 %s9, %s16
    %p18 = scmp.eq.s32.totalorder %s17, 0
    %s20 = sadd.s32 %s19, 1
    %s21 = scalar_select %p18, %s19, %s20
    %p24 = pneg %p18
    %p25 = scmp.eq.s32.totalorder %s9, 1
    %p26 = por %p24, %p25
    %p27 = scmp.ne.s32.totalorder %s19, %s22
    %p28 = scmp.eq.s32.totalorder %s9, 0
    %p29 = por %p27, %p28
    %p30 = scmp.ne.s32.totalorder %s19, %s22
    %p31 = scmp.eq.s32.totalorder %s14, 1
    %p32 = por %p30, %p31
    %p33 = scmp.ne.s32.totalorder %s22, %s23
    %p34 = scmp.eq.s32.totalorder %s14, 0
    %p35 = por %p33, %p34
    %p36 = scmp.ne.s32.totalorder %s22, %s23
    %p37 = scmp.eq.s32.totalorder %s15, 1
    %p38 = por %p36, %p37
    %p40 = scmp.ne.s32.totalorder %s23, %s39
    %p41 = scmp.eq.s32.totalorder %s15, 0
    %p42 = por %p40, %p41
    %s44 = sadd.s32 %s43, 1
    %p47 = scmp.eq.s32.totalorder %s9, 1
    %p48 = scmp.ne.s32.totalorder %s43, %s45
    %p49 = scmp.eq.s32.totalorder %s9, 0
    %p50 = por %p48, %p49
    %p51 = scmp.ne.s32.totalorder %s43, %s45
    %p52 = scmp.eq.s32.totalorder %s14, 1
    %p53 = por %p51, %p52
    %p54 = scmp.ne.s32.totalorder %s45, %s46
    %p55 = scmp.eq.s32.totalorder %s14, 0
    %p56 = por %p54, %p55
    %p57 = scmp.ne.s32.totalorder %s45, %s46
    %p58 = scmp.eq.s32.totalorder %s15, 1
    %p59 = por %p57, %p58
    %p61 = scmp.ne.s32.totalorder %s46, %s60
    %p62 = scmp.eq.s32.totalorder %s15, 0
    %p63 = por %p61, %p62
    %s65 = sadd.s32 %s64, 1
    %p68 = scmp.eq.s32.totalorder %s9, 1
    %p69 = scmp.ne.s32.totalorder %s64, %s66
    %p70 = scmp.eq.s32.totalorder %s9, 0
    %p71 = por %p69, %p70
    %p72 = scmp.ne.s32.totalorder %s64, %s66
    %p73 = scmp.eq.s32.totalorder %s14, 1
    %p74 = por %p72, %p73
    %p75 = scmp.ne.s32.totalorder %s66, %s67
    %p76 = scmp.eq.s32.totalorder %s14, 0
    %p77 = por %p75, %p76
    %p78 = scmp.ne.s32.totalorder %s66, %s67
    %p79 = scmp.eq.s32.totalorder %s15, 1
    %p80 = por %p78, %p79
    %p82 = scmp.ne.s32.totalorder %s67, %s81
    %p83 = scmp.eq.s32.totalorder %s15, 0
    %p84 = por %p82, %p83
    %s85 = ssub.s32 %s9, %s16
    %p86 = scmp.eq.s32.totalorder %s85, 0
    %s88 = sadd.s32 %s87, 1
    %s89 = scalar_select %p86, %s87, %s88
    %p92 = pneg %p86
    %p93 = scmp.eq.s32.totalorder %s9, 1
    %p94 = por %p92, %p93
    %p95 = scmp.ne.s32.totalorder %s87, %s90
    %p96 = scmp.eq.s32.totalorder %s9, 0
    %p97 = por %p95, %p96
    %p98 = scmp.ne.s32.totalorder %s87, %s90
    %p99 = scmp.eq.s32.totalorder %s14, 1
    %p100 = por %p98, %p99
    %p101 = scmp.ne.s32.totalorder %s90, %s91
    %p102 = scmp.eq.s32.totalorder %s14, 0
    %p103 = por %p101, %p102
    %p104 = scmp.ne.s32.totalorder %s90, %s91
    %p105 = scmp.eq.s32.totalorder %s15, 1
    %p106 = por %p104, %p105
    %p108 = scmp.ne.s32.totalorder %s91, %s107
    %p109 = scmp.eq.s32.totalorder %s15, 0
    %p110 = por %p108, %p109
    %p111 = scmp.le.s32.totalorder 1, %s9
    %p112 = scmp.lt.s32.totalorder %s9, 3
    %p113 = pnand %p111, %p112
    %p114 = pneg %p113
    // Predicated region
    $region9: #{_lambda_.2} parent=5 // pred_check
      _
    $region10: #{_lambda_.2} parent=5 // pred_check_branch
      %116 = sbr.rel (%p113) target = $region12
    $region11: #{_lambda_.2} parent=5 // pred_region
      %s117 = ssub.s32 %s9, 1
      // Predicated region
      $region13: #{_lambda_.2} parent=11 // pred_check
        %p118 = pneg %p56
      $region14: #{_lambda_.2} parent=11 // pred_check_branch
        %120 = sbr.rel (%p118) target = $region16
      $region15: #{_lambda_.2} parent=11 // pred_region
        _
      $region16: #{_lambda_.2} parent=11 // pred_fallthru
        _
      // Predicated region
      $region17: #{_lambda_.2} parent=11 // pred_check
        %p121 = pneg %p77
      $region18: #{_lambda_.2} parent=11 // pred_check_branch
        %123 = sbr.rel (%p121) target = $region20
      $region19: #{_lambda_.2} parent=11 // pred_region
        _
      $region20: #{_lambda_.2} parent=11 // pred_fallthru
        _
    $region12: #{_lambda_.2} parent=5 // pred_fallthru
      _
    %p124 = scmp.lt.s32.totalorder %s9, 2
    // Predicated region
    $region21: #{_lambda_.2} parent=5 // pred_check
      %p125 = pneg %p124
    $region22: #{_lambda_.2} parent=5 // pred_check_branch
      %127 = sbr.rel (%p125) target = $region24
    $region23: #{_lambda_.2} parent=5 // pred_region
      // Predicated region
      $region25: #{_lambda_.2} parent=23 // pred_check
        %p128 = pneg %p29
      $region26: #{_lambda_.2} parent=23 // pred_check_branch
        %130 = sbr.rel (%p128) target = $region28
      $region27: #{_lambda_.2} parent=23 // pred_region
        %p131 = scmp.lt.s32.totalorder %s9, 1
        %s132 = scalar_select %p131, %s9, 1
        %s133 = smul.addr %s132, 2
        %s134 = smul.addr %s133, 8
        %s135 = scalar_lea.vmem %s0, %s134
      $region28: #{_lambda_.2} parent=23 // pred_fallthru
        _
    $region24: #{_lambda_.2} parent=5 // pred_fallthru
      _
    %p136 = scmp.le.s32.totalorder 1, %s9
    %p137 = scmp.lt.s32.totalorder %s9, 3
    %p138 = pnand %p136, %p137
    %p139 = pneg %p138
    // Predicated region
    $region29: #{_lambda_.2} parent=5 // pred_check
      _
    $region30: #{_lambda_.2} parent=5 // pred_check_branch
      %141 = sbr.rel (%p138) target = $region32
    $region31: #{_lambda_.2} parent=5 // pred_region
      %s142 = ssub.s32 %s9, 1
      %p143 = scmp.lt.s32.totalorder %s14, 1
      %s144 = scalar_select %p143, %s14, 1
      %s145 = smul.addr %s144, 2
      %s146 = smul.addr %s145, 8
      %s147 = scalar_lea.vmem %s0, %s146
      %p148 = pneg %p35
      %p149 = pneg %p32
      %p150 = pneg %p56
      %p151 = pneg %p53
      %p152 = pneg %p77
      %p153 = pneg %p74
      %p154 = pneg %p103
      %p155 = pneg %p100
      %p156 = scmp.lt.s32.totalorder %s14, 1
      %s157 = scalar_select %p156, %s14, 1
      %s158 = smul.addr %s157, 8
      %s159 = scalar_lea.vmem %s3, %s158
      %p160 = scmp.lt.s32.totalorder %s14, 1
      %s161 = scalar_select %p160, %s14, 1
      %s162 = smul.addr %s161, 2
      %s163 = smul.addr %s162, 8
      %s164 = scalar_lea.vmem %s0, %s163
      %p165 = scmp.lt.s32.totalorder %s14, 1
      %s166 = scalar_select %p165, %s14, 1
      %s167 = smul.addr %s166, 8
      %s168 = scalar_lea.vmem %s3, %s167
      %vm169 = vcmask 162816
      %170 = vst.msk [vmem:[#allocation2] sm:$0xff] %vm169, 0.0
      %171 = vst.msk [vmem:[#allocation2 + $0x8] sm:$0xff] %vm169, 0.0
      %vm172 = vcmask 158720
      %173 = vst.msk [vmem:[#allocation2 + $0x10] sm:$0xf] %vm172, 0.0
      %v174 = vld [vmem:[%s164] sm:$0xff]
      %v175 = vld [vmem:[%s164 + $0x8] sm:$0xff]
      %178 = vrot.lane.b32.xlu0 %v174, 2
      %v179 = vpop.permute.xlu0 %178
      %180 = vrot.lane.b32.xlu0 %v175, 2
      %v181 = vpop.permute.xlu0 %180
      %vm184 = vcmask 146448
      %185 = vst.msk [vmem:[#allocation2 + $0x2] sm:$0xff] %vm184, %v179
      %186 = vst.msk [vmem:[#allocation2 + $0xa] sm:$0xff] %vm184, %v181
      %v187 = vld [vmem:[#allocation2] sm:$0xff]
      %v188 = vld [vmem:[#allocation2 + $0x8] sm:$0xff]
      %189 = vst.msk [vmem:[#allocation3] sm:$0xff] %vm169, %v187
      %190 = vst.msk [vmem:[#allocation3 + $0x8] sm:$0xff] %vm169, %v188
      %v191 = vld [vmem:[#allocation2 + $0x1] sm:$0xff]
      %v192 = vld [vmem:[#allocation2 + $0x9] sm:$0xff]
      %195 = vrot.lane.b32.xlu0 %v191, 20
      %v196 = vpop.permute.xlu0 %195
      %197 = vrot.lane.b32.xlu0 %v192, 20
      %v198 = vpop.permute.xlu0 %197
      %vm201 = vcmask 326816
      %202 = vst.msk [vmem:[#allocation3] sm:$0xff] %vm201, %v196
      %203 = vst.msk [vmem:[#allocation3 + $0x8] sm:$0xff] %vm201, %v198
      %v204 = vld [vmem:[#allocation2 + $0x2] sm:$0xff]
      %v205 = vld [vmem:[#allocation2 + $0xa] sm:$0xff]
      %208 = vrot.lane.b32.xlu0 %v204, 40
      %v209 = vpop.permute.xlu0 %208
      %210 = vrot.lane.b32.xlu0 %v205, 40
      %v211 = vpop.permute.xlu0 %210
      %vm214 = vcmask 490816
      %215 = vst.msk [vmem:[#allocation3] sm:$0xff] %vm214, %v209
      %216 = vst.msk [vmem:[#allocation3 + $0x8] sm:$0xff] %vm214, %v211
      %v217 = vld [vmem:[#allocation2 + $0x3] sm:$0xff]
      %v218 = vld [vmem:[#allocation2 + $0xb] sm:$0xff]
      %221 = vrot.lane.b32.xlu0 %v217, 60
      %v222 = vpop.permute.xlu0 %221
      %223 = vrot.lane.b32.xlu0 %v218, 60
      %v224 = vpop.permute.xlu0 %223
      %vm227 = vcmask 654816
      %228 = vst.msk [vmem:[#allocation3] sm:$0xff] %vm227, %v222
      %229 = vst.msk [vmem:[#allocation3 + $0x8] sm:$0xff] %vm227, %v224
      %v230 = vld [vmem:[#allocation2 + $0x4] sm:$0xff]
      %v231 = vld [vmem:[#allocation2 + $0xc] sm:$0xff]
      %234 = vrot.lane.b32.xlu0 %v230, 80
      %v235 = vpop.permute.xlu0 %234
      %236 = vrot.lane.b32.xlu0 %v231, 80
      %v237 = vpop.permute.xlu0 %236
      %vm240 = vcmask 818816
      %241 = vst.msk [vmem:[#allocation3] sm:$0xff] %vm240, %v235
      %242 = vst.msk [vmem:[#allocation3 + $0x8] sm:$0xff] %vm240, %v237
      %v243 = vld [vmem:[#allocation3] ss:$2 sm:$0xff]
      %s244 = scalar_lea.vmem [#allocation3], 1
      %v245 = vld [vmem:[%s244] ss:$2 sm:$0xff]
      %v246 = vld [vmem:[%s1] sm:$0xff]
      %v247 = vld [vmem:[%s1 + $0x8] sm:$0xff]
      %v248 = vld [vmem:[%s1 + $0x10] sm:$0xff]
      %v249 = vld [vmem:[%s1 + $0x18] sm:$0xff]
      %v250 = vld [vmem:[%s1 + $0x20] sm:$0xff]
      %v251 = vld [vmem:[%s1 + $0x28] sm:$0xff]
      %v252 = vld [vmem:[%s1 + $0x30] sm:$0xff]
      %v253 = vld [vmem:[%s1 + $0x38] sm:$0xff]
      %v254 = vld [vmem:[%s1 + $0x40] sm:$0xff]
      %v255 = vld [vmem:[%s1 + $0x48] sm:$0xff]
      %v256 = vld [vmem:[%s1 + $0x50] sm:$0xff]
      %v257 = vld [vmem:[%s1 + $0x58] sm:$0xff]
      %v258 = vld [vmem:[%s1 + $0x60] sm:$0xf]
      %vm259 = vcmask 818176
      %v261 = vsel %vm259, %v243, 0
      %vm263 = vcmask 1043456
      %v265 = vsel %vm263, %v258, 0
      %267 = vmatprep.subr.mxu0 0.0
      %268 = vmatpush1.msra.mxu0 %v246
      %269 = vmatprep.subr.mxu0 0.0
      %270 = vmatpush1.msra.mxu0 %v247
      %271 = vmatprep.subr.mxu0 0.0
      %272 = vmatpush1.msra.mxu0 %v248
      %273 = vmatprep.subr.mxu0 0.0
      %274 = vmatpush1.msra.mxu0 %v249
      %275 = vmatprep.subr.mxu0 0.0
      %276 = vmatpush1.msra.mxu0 %v250
      %277 = vmatprep.subr.mxu0 0.0
      %278 = vmatpush1.msra.mxu0 %v251
      %279 = vmatprep.subr.mxu0 0.0
      %280 = vmatpush1.msra.mxu0 %v252
      %281 = vmatprep.subr.mxu0 0.0
      %282 = vmatpush1.msra.mxu0 %v253
      %283 = vmatprep.subr.mxu0 0.0
      %284 = vmatpush1.msra.mxu0 %v254
      %285 = vmatprep.subr.mxu0 0.0
      %286 = vmatpush1.msra.mxu0 %v255
      %287 = vmatprep.subr.mxu0 0.0
      %288 = vmatpush1.msra.mxu0 %v256
      %289 = vmatprep.subr.mxu0 0.0
      %290 = vmatpush1.msra.mxu0 %v257
      %291 = vmatprep.subr.mxu0 0.0
      %292 = vmatpush1.msra.mxu0 %v265
      %293 = vmatprep.subr.mxu0 0.0
      %294 = vmatpush1.msra.mxu0 0.0
      %295 = vmatprep.subr.mxu0 0.0
      %296 = vmatpush1.msra.mxu0 0.0
      %297 = vmatprep.subr.mxu0 0.0
      %298 = vmatpush1.msra.mxu0 0.0
      %299 = vmatprep.subr.mxu0 0.0
      %300 = vmatpush1.msra.mxu0 0.0
      %301 = vmatprep.subr.mxu0 0.0
      %302 = vmatpush1.msra.mxu0 0.0
      %303 = vmatprep.subr.mxu0 0.0
      %304 = vmatpush1.msra.mxu0 0.0
      %305 = vmatprep.subr.mxu0 0.0
      %306 = vmatpush1.msra.mxu0 0.0
      %307 = vmatprep.subr.mxu0 0.0
      %308 = vmatpush1.msra.mxu0 0.0
      %309 = vmatprep.subr.mxu0 0.0
      %310 = vmatpush1.msra.mxu0 0.0
      %311 = vmatprep.subr.mxu0 0.0
      %312 = vmatpush1.msra.mxu0 0.0
      %313 = vmatprep.subr.mxu0 0.0
      %314 = vmatpush1.msra.mxu0 0.0
      %315 = vmatprep.subr.mxu0 0.0
      %316 = vmatpush1.msra.mxu0 0.0
      %317 = vmatprep.subr.mxu0 0.0
      %318 = vmatpush1.msra.mxu0 0.0
      %319 = vmatprep.subr.mxu0 0.0
      %320 = vmatpush1.msra.mxu0 0.0
      %321 = vmatprep.subr.mxu0 0.0
      %322 = vmatpush1.msra.mxu0 0.0
      %323 = vmatprep.subr.mxu0 0.0
      %324 = vmatpush1.msra.mxu0 0.0
      %325 = vmatprep.subr.mxu0 0.0
      %326 = vmatpush1.msra.mxu0 0.0
      %327 = vmatprep.subr.mxu0 0.0
      %328 = vmatpush1.msra.mxu0 0.0
      %329 = vmatprep.subr.mxu0 0.0
      %330 = vmatpush1.msra.mxu0 0.0
      %331 = vmatprep.mubr.f32.mxu0 0.0
      %332 = vmatmul.mubr.f32.gmra.mrb[0].mxu0 %v261
      %v333 = vpop.f32.mrb[0].mxu0
      %v334 = vadd.f32 0.0, %v333
      %v335 = vpop.f32.mrb[0].mxu0
      %336 = vdwg.mxu0
      %v337 = vld [vmem:[%s2] sm:$0xff]
      %v338 = vld [vmem:[%s2 + $0x8] sm:$0xff]
      %v339 = vld [vmem:[%s2 + $0x10] sm:$0xff]
      %v340 = vld [vmem:[%s2 + $0x18] sm:$0xff]
      %v341 = vld [vmem:[%s2 + $0x20] sm:$0xff]
      %v342 = vld [vmem:[%s2 + $0x28] sm:$0xff]
      %v343 = vld [vmem:[%s2 + $0x30] sm:$0xff]
      %v344 = vld [vmem:[%s2 + $0x38] sm:$0xff]
      %v345 = vld [vmem:[%s2 + $0x40] sm:$0xff]
      %v346 = vld [vmem:[%s2 + $0x48] sm:$0xff]
      %v347 = vld [vmem:[%s2 + $0x50] sm:$0xff]
      %v348 = vld [vmem:[%s2 + $0x58] sm:$0xff]
      %v349 = vld [vmem:[%s2 + $0x60] sm:$0xf]
      %v351 = vsel %vm263, %v349, 0
      %353 = vmatprep.subr.mxu0 0.0
      %354 = vmatpush1.msra.mxu0 %v337
      %355 = vmatprep.subr.mxu0 0.0
      %356 = vmatpush1.msra.mxu0 %v338
      %357 = vmatprep.subr.mxu0 0.0
      %358 = vmatpush1.msra.mxu0 %v339
      %359 = vmatprep.subr.mxu0 0.0
      %360 = vmatpush1.msra.mxu0 %v340
      %361 = vmatprep.subr.mxu0 0.0
      %362 = vmatpush1.msra.mxu0 %v341
      %363 = vmatprep.subr.mxu0 0.0
      %364 = vmatpush1.msra.mxu0 %v342
      %365 = vmatprep.subr.mxu0 0.0
      %366 = vmatpush1.msra.mxu0 %v343
      %367 = vmatprep.subr.mxu0 0.0
      %368 = vmatpush1.msra.mxu0 %v344
      %369 = vmatprep.subr.mxu0 0.0
      %370 = vmatpush1.msra.mxu0 %v345
      %371 = vmatprep.subr.mxu0 0.0
      %372 = vmatpush1.msra.mxu0 %v346
      %373 = vmatprep.subr.mxu0 0.0
      %374 = vmatpush1.msra.mxu0 %v347
      %375 = vmatprep.subr.mxu0 0.0
      %376 = vmatpush1.msra.mxu0 %v348
      %377 = vmatprep.subr.mxu0 0.0
      %378 = vmatpush1.msra.mxu0 %v351
      %379 = vmatprep.subr.mxu0 0.0
      %380 = vmatpush1.msra.mxu0 0.0
      %381 = vmatprep.subr.mxu0 0.0
      %382 = vmatpush1.msra.mxu0 0.0
      %383 = vmatprep.subr.mxu0 0.0
      %384 = vmatpush1.msra.mxu0 0.0
      %385 = vmatprep.subr.mxu0 0.0
      %386 = vmatpush1.msra.mxu0 0.0
      %387 = vmatprep.subr.mxu0 0.0
      %388 = vmatpush1.msra.mxu0 0.0
      %389 = vmatprep.subr.mxu0 0.0
      %390 = vmatpush1.msra.mxu0 0.0
      %391 = vmatprep.subr.mxu0 0.0
      %392 = vmatpush1.msra.mxu0 0.0
      %393 = vmatprep.subr.mxu0 0.0
      %394 = vmatpush1.msra.mxu0 0.0
      %395 = vmatprep.subr.mxu0 0.0
      %396 = vmatpush1.msra.mxu0 0.0
      %397 = vmatprep.subr.mxu0 0.0
      %398 = vmatpush1.msra.mxu0 0.0
      %399 = vmatprep.subr.mxu0 0.0
      %400 = vmatpush1.msra.mxu0 0.0
      %401 = vmatprep.subr.mxu0 0.0
      %402 = vmatpush1.msra.mxu0 0.0
      %403 = vmatprep.subr.mxu0 0.0
      %404 = vmatpush1.msra.mxu0 0.0
      %405 = vmatprep.subr.mxu0 0.0
      %406 = vmatpush1.msra.mxu0 0.0
      %407 = vmatprep.subr.mxu0 0.0
      %408 = vmatpush1.msra.mxu0 0.0
      %409 = vmatprep.subr.mxu0 0.0
      %410 = vmatpush1.msra.mxu0 0.0
      %411 = vmatprep.subr.mxu0 0.0
      %412 = vmatpush1.msra.mxu0 0.0
      %413 = vmatprep.subr.mxu0 0.0
      %414 = vmatpush1.msra.mxu0 0.0
      %415 = vmatprep.subr.mxu0 0.0
      %416 = vmatpush1.msra.mxu0 0.0
      %417 = vmatprep.mubr.f32.mxu0 0.0
      %418 = vmatmul.mubr.f32.gmra.mrb[0].mxu0 %v261
      %v419 = vpop.f32.mrb[0].mxu0
      %v420 = vadd.f32 0.0, %v419
      %v421 = vpop.f32.mrb[0].mxu0
      %422 = vdwg.mxu0
      %v423 = vmax.f32 %v334, %v420
      %v425 = vsel %vm259, %v245, 0
      %427 = vmatprep.subr.mxu0 0.0
      %428 = vmatpush1.msra.mxu0 %v246
      %429 = vmatprep.subr.mxu0 0.0
      %430 = vmatpush1.msra.mxu0 %v247
      %431 = vmatprep.subr.mxu0 0.0
      %432 = vmatpush1.msra.mxu0 %v248
      %433 = vmatprep.subr.mxu0 0.0
      %434 = vmatpush1.msra.mxu0 %v249
      %435 = vmatprep.subr.mxu0 0.0
      %436 = vmatpush1.msra.mxu0 %v250
      %437 = vmatprep.subr.mxu0 0.0
      %438 = vmatpush1.msra.mxu0 %v251
      %439 = vmatprep.subr.mxu0 0.0
      %440 = vmatpush1.msra.mxu0 %v252
      %441 = vmatprep.subr.mxu0 0.0
      %442 = vmatpush1.msra.mxu0 %v253
      %443 = vmatprep.subr.mxu0 0.0
      %444 = vmatpush1.msra.mxu0 %v254
      %445 = vmatprep.subr.mxu0 0.0
      %446 = vmatpush1.msra.mxu0 %v255
      %447 = vmatprep.subr.mxu0 0.0
      %448 = vmatpush1.msra.mxu0 %v256
      %449 = vmatprep.subr.mxu0 0.0
      %450 = vmatpush1.msra.mxu0 %v257
      %451 = vmatprep.subr.mxu0 0.0
      %452 = vmatpush1.msra.mxu0 %v265
      %453 = vmatprep.subr.mxu0 0.0
      %454 = vmatpush1.msra.mxu0 0.0
      %455 = vmatprep.subr.mxu0 0.0
      %456 = vmatpush1.msra.mxu0 0.0
      %457 = vmatprep.subr.mxu0 0.0
      %458 = vmatpush1.msra.mxu0 0.0
      %459 = vmatprep.subr.mxu0 0.0
      %460 = vmatpush1.msra.mxu0 0.0
      %461 = vmatprep.subr.mxu0 0.0
      %462 = vmatpush1.msra.mxu0 0.0
      %463 = vmatprep.subr.mxu0 0.0
      %464 = vmatpush1.msra.mxu0 0.0
      %465 = vmatprep.subr.mxu0 0.0
      %466 = vmatpush1.msra.mxu0 0.0
      %467 = vmatprep.subr.mxu0 0.0
      %468 = vmatpush1.msra.mxu0 0.0
      %469 = vmatprep.subr.mxu0 0.0
      %470 = vmatpush1.msra.mxu0 0.0
      %471 = vmatprep.subr.mxu0 0.0
      %472 = vmatpush1.msra.mxu0 0.0
      %473 = vmatprep.subr.mxu0 0.0
      %474 = vmatpush1.msra.mxu0 0.0
      %475 = vmatprep.subr.mxu0 0.0
      %476 = vmatpush1.msra.mxu0 0.0
      %477 = vmatprep.subr.mxu0 0.0
      %478 = vmatpush1.msra.mxu0 0.0
      %479 = vmatprep.subr.mxu0 0.0
      %480 = vmatpush1.msra.mxu0 0.0
      %481 = vmatprep.subr.mxu0 0.0
      %482 = vmatpush1.msra.mxu0 0.0
      %483 = vmatprep.subr.mxu0 0.0
      %484 = vmatpush1.msra.mxu0 0.0
      %485 = vmatprep.subr.mxu0 0.0
      %486 = vmatpush1.msra.mxu0 0.0
      %487 = vmatprep.subr.mxu0 0.0
      %488 = vmatpush1.msra.mxu0 0.0
      %489 = vmatprep.subr.mxu0 0.0
      %490 = vmatpush1.msra.mxu0 0.0
      %491 = vmatprep.mubr.f32.mxu0 0.0
      %492 = vmatmul.mubr.f32.gmra.mrb[0].mxu0 %v425
      %v493 = vpop.f32.mrb[0].mxu0
      %v494 = vadd.f32 0.0, %v493
      %v495 = vpop.f32.mrb[0].mxu0
      %496 = vdwg.mxu0
      %497 = vmatprep.subr.mxu0 0.0
      %498 = vmatpush1.msra.mxu0 %v337
      %499 = vmatprep.subr.mxu0 0.0
      %500 = vmatpush1.msra.mxu0 %v338
      %501 = vmatprep.subr.mxu0 0.0
      %502 = vmatpush1.msra.mxu0 %v339
      %503 = vmatprep.subr.mxu0 0.0
      %504 = vmatpush1.msra.mxu0 %v340
      %505 = vmatprep.subr.mxu0 0.0
      %506 = vmatpush1.msra.mxu0 %v341
      %507 = vmatprep.subr.mxu0 0.0
      %508 = vmatpush1.msra.mxu0 %v342
      %509 = vmatprep.subr.mxu0 0.0
      %510 = vmatpush1.msra.mxu0 %v343
      %511 = vmatprep.subr.mxu0 0.0
      %512 = vmatpush1.msra.mxu0 %v344
      %513 = vmatprep.subr.mxu0 0.0
      %514 = vmatpush1.msra.mxu0 %v345
      %515 = vmatprep.subr.mxu0 0.0
      %516 = vmatpush1.msra.mxu0 %v346
      %517 = vmatprep.subr.mxu0 0.0
      %518 = vmatpush1.msra.mxu0 %v347
      %519 = vmatprep.subr.mxu0 0.0
      %520 = vmatpush1.msra.mxu0 %v348
      %521 = vmatprep.subr.mxu0 0.0
      %522 = vmatpush1.msra.mxu0 %v351
      %523 = vmatprep.subr.mxu0 0.0
      %524 = vmatpush1.msra.mxu0 0.0
      %525 = vmatprep.subr.mxu0 0.0
      %526 = vmatpush1.msra.mxu0 0.0
      %527 = vmatprep.subr.mxu0 0.0
      %528 = vmatpush1.msra.mxu0 0.0
      %529 = vmatprep.subr.mxu0 0.0
      %530 = vmatpush1.msra.mxu0 0.0
      %531 = vmatprep.subr.mxu0 0.0
      %532 = vmatpush1.msra.mxu0 0.0
      %533 = vmatprep.subr.mxu0 0.0
      %534 = vmatpush1.msra.mxu0 0.0
      %535 = vmatprep.subr.mxu0 0.0
      %536 = vmatpush1.msra.mxu0 0.0
      %537 = vmatprep.subr.mxu0 0.0
      %538 = vmatpush1.msra.mxu0 0.0
      %539 = vmatprep.subr.mxu0 0.0
      %540 = vmatpush1.msra.mxu0 0.0
      %541 = vmatprep.subr.mxu0 0.0
      %542 = vmatpush1.msra.mxu0 0.0
      %543 = vmatprep.subr.mxu0 0.0
      %544 = vmatpush1.msra.mxu0 0.0
      %545 = vmatprep.subr.mxu0 0.0
      %546 = vmatpush1.msra.mxu0 0.0
      %547 = vmatprep.subr.mxu0 0.0
      %548 = vmatpush1.msra.mxu0 0.0
      %549 = vmatprep.subr.mxu0 0.0
      %550 = vmatpush1.msra.mxu0 0.0
      %551 = vmatprep.subr.mxu0 0.0
      %552 = vmatpush1.msra.mxu0 0.0
      %553 = vmatprep.subr.mxu0 0.0
      %554 = vmatpush1.msra.mxu0 0.0
      %555 = vmatprep.subr.mxu0 0.0
      %556 = vmatpush1.msra.mxu0 0.0
      %557 = vmatprep.subr.mxu0 0.0
      %558 = vmatpush1.msra.mxu0 0.0
      %559 = vmatprep.subr.mxu0 0.0
      %560 = vmatpush1.msra.mxu0 0.0
      %561 = vmatprep.mubr.f32.mxu0 0.0
      %562 = vmatmul.mubr.f32.gmra.mrb[0].mxu0 %v425
      %v563 = vpop.f32.mrb[0].mxu0
      %v564 = vadd.f32 0.0, %v563
      %v565 = vpop.f32.mrb[0].mxu0
      %566 = vdwg.mxu0
      %v567 = vmax.f32 %v494, %v564
      %v568 = vmax.f32 %v423, %v567
      %vm569 = vcmp.ge.f32.partialorder %v568, 0.0
      %v570 = vmul.f32 %v568, 0.01
      %v571 = vsel %vm569, %v568, %v570
      %vm572 = vcmask 523264
      %573 = vst.msk [vmem:[%s168] sm:$0xff] %vm572, %v571
      %p574 = scmp.lt.s32.totalorder %s14, 1
      %s575 = scalar_select %p574, %s14, 1
      %s576 = smul.addr %s575, 8
      %s577 = scalar_lea.vmem %s3, %s576
      // Predicated region
      $region33: #{_lambda_.2} parent=31 // pred_check
        %p578 = pneg %p100
      $region34: #{_lambda_.2} parent=31 // pred_check_branch
        %580 = sbr.rel (%p578) target = $region36
      $region35: #{_lambda_.2} parent=31 // pred_region
        _
      $region36: #{_lambda_.2} parent=31 // pred_fallthru
        _
    $region32: #{_lambda_.2} parent=5 // pred_fallthru
      _
    %p581 = scmp.le.s32.totalorder 2, %s9
    // Predicated region
    $region37: #{_lambda_.2} parent=5 // pred_check
      %p582 = pneg %p581
    $region38: #{_lambda_.2} parent=5 // pred_check_branch
      %584 = sbr.rel (%p582) target = $region40
    $region39: #{_lambda_.2} parent=5 // pred_region
      %s585 = ssub.s32 %s9, 2
      // Predicated region
      $region41: #{_lambda_.2} parent=39 // pred_check
        %p586 = pneg %p106
      $region42: #{_lambda_.2} parent=39 // pred_check_branch
        %588 = sbr.rel (%p586) target = $region44
      $region43: #{_lambda_.2} parent=39 // pred_region
        %p589 = scmp.lt.s32.totalorder %s15, 1
        %s590 = scalar_select %p589, %s15, 1
        %s591 = smul.addr %s590, 8
        %s592 = scalar_lea.vmem %s3, %s591
      $region44: #{_lambda_.2} parent=39 // pred_fallthru
        _
    $region40: #{_lambda_.2} parent=5 // pred_fallthru
      _
  $region6: #{_lambda_.2} parent=0 // loop_footer
    %s13 = sadd.s32 1, %s9
  $region7: #{_lambda_.2} parent=0 // loop_footer_branch
    %8 = sbr.rel target = $region3
  $region8: #{_lambda_.2} parent=0 // loop_exit
    _

// kernel: _lambda_.3
$region0: #{_lambda_.3}
  #allocation0 [shape = 'u32[]', space=smem, size = 0x4, offset = 0x4, fixed_abs, tag = 'smem constant byte address 0x4 - core index']
  #allocation1 [shape = 'u32[144,128]{1,0:T(1,128)}', space=vmem, size = 0x12000, scoped, tag = 'internal scratch']
  #allocation2 [shape = 'f32[6,80]{1,0:T(8,128)}', space=vmem, size = 0x1000, scoped, tag = 'scratch operand']
  #allocation3 [shape = 'f32[4,240]{1,0:T(4,128)}', space=vmem, size = 0x1000, scoped, tag = 'scratch operand']
  %s0 = inlined_call_operand.vmem [shape: f32[4,4,64], index: 0, kind: input, shape index: {}]
  %s1 = inlined_call_operand.vmem [shape: f32[240,128], index: 1, kind: input, shape index: {}]
  %s2 = inlined_call_operand.vmem [shape: f32[4,4,128], index: 2, kind: output, shape index: {}]
  %s3 = sld [smem:[#allocation0]]
  $region41: #{_lambda_.3} parent=0
    _
  %s5 = ssub.s32 1, %s3
  %s6 = scalar_select 0, %s5, %s3
  loop: start=0, step=1, limit=6
  $region2: #{_lambda_.3} parent=0 // loop_pre_header
    _
  $region3: #{_lambda_.3} parent=0 // loop_header
    %s8 = sphi 0, %s12
    %p9 = scmp.ge.s32.totalorder %s8, 6
    %s18 = sphi 0, %s20
    %s21 = sphi 0, %s18
    %s22 = sphi 0, %s21
    %s38 = sphi 0, %s22
    %s42 = sphi 0, %s42
    %s44 = sphi 0, %s42
    %s45 = sphi 0, %s44
    %s59 = sphi 0, %s45
    %s65 = sphi 0, %s67
    %s68 = sphi 0, %s65
    %s69 = sphi 0, %s68
    %s85 = sphi 0, %s69
  $region4: #{_lambda_.3} parent=0 // loop_header_branch
    %11 = sbr.rel (%p9) target = $region8
  $region5: #{_lambda_.3} parent=0 // loop_body
    %s13 = ssub.s32 %s8, 1
    %s14 = ssub.s32 %s8, 2
    %s15 = sadd.s32 %s8, 1
    %s16 = ssub.s32 %s8, %s15
    %p17 = scmp.eq.s32.totalorder %s16, 0
    %s19 = sadd.s32 %s18, 1
    %s20 = scalar_select %p17, %s18, %s19
    %p23 = pneg %p17
    %p24 = scmp.eq.s32.totalorder %s8, 3
    %p25 = por %p23, %p24
    %p26 = scmp.ne.s32.totalorder %s18, %s21
    %p27 = scmp.eq.s32.totalorder %s8, 0
    %p28 = por %p26, %p27
    %p29 = scmp.ne.s32.totalorder %s18, %s21
    %p30 = scmp.eq.s32.totalorder %s13, 3
    %p31 = por %p29, %p30
    %p32 = scmp.ne.s32.totalorder %s21, %s22
    %p33 = scmp.eq.s32.totalorder %s13, 0
    %p34 = por %p32, %p33
    %p35 = scmp.ne.s32.totalorder %s21, %s22
    %p36 = scmp.eq.s32.totalorder %s14, 3
    %p37 = por %p35, %p36
    %p39 = scmp.ne.s32.totalorder %s22, %s38
    %p40 = scmp.eq.s32.totalorder %s14, 0
    %p41 = por %p39, %p40
    %s43 = sadd.s32 %s42, 1
    %p46 = scmp.eq.s32.totalorder %s8, 3
    %p47 = scmp.ne.s32.totalorder %s42, %s44
    %p48 = scmp.eq.s32.totalorder %s8, 0
    %p49 = por %p47, %p48
    %p50 = scmp.ne.s32.totalorder %s42, %s44
    %p51 = scmp.eq.s32.totalorder %s13, 3
    %p52 = por %p50, %p51
    %p53 = scmp.ne.s32.totalorder %s44, %s45
    %p54 = scmp.eq.s32.totalorder %s13, 0
    %p55 = por %p53, %p54
    %p56 = scmp.ne.s32.totalorder %s44, %s45
    %p57 = scmp.eq.s32.totalorder %s14, 3
    %p58 = por %p56, %p57
    %p60 = scmp.ne.s32.totalorder %s45, %s59
    %p61 = scmp.eq.s32.totalorder %s14, 0
    %p62 = por %p60, %p61
    %s63 = ssub.s32 %s8, %s15
    %p64 = scmp.eq.s32.totalorder %s63, 0
    %s66 = sadd.s32 %s65, 1
    %s67 = scalar_select %p64, %s65, %s66
    %p70 = pneg %p64
    %p71 = scmp.eq.s32.totalorder %s8, 3
    %p72 = por %p70, %p71
    %p73 = scmp.ne.s32.totalorder %s65, %s68
    %p74 = scmp.eq.s32.totalorder %s8, 0
    %p75 = por %p73, %p74
    %p76 = scmp.ne.s32.totalorder %s65, %s68
    %p77 = scmp.eq.s32.totalorder %s13, 3
    %p78 = por %p76, %p77
    %p79 = scmp.ne.s32.totalorder %s68, %s69
    %p80 = scmp.eq.s32.totalorder %s13, 0
    %p81 = por %p79, %p80
    %p82 = scmp.ne.s32.totalorder %s68, %s69
    %p83 = scmp.eq.s32.totalorder %s14, 3
    %p84 = por %p82, %p83
    %p86 = scmp.ne.s32.totalorder %s69, %s85
    %p87 = scmp.eq.s32.totalorder %s14, 0
    %p88 = por %p86, %p87
    %p89 = scmp.le.s32.totalorder 1, %s8
    %p90 = scmp.lt.s32.totalorder %s8, 5
    %p91 = pnand %p89, %p90
    %p92 = pneg %p91
    // Predicated region
    $region9: #{_lambda_.3} parent=5 // pred_check
      _
    $region10: #{_lambda_.3} parent=5 // pred_check_branch
      %94 = sbr.rel (%p91) target = $region12
    $region11: #{_lambda_.3} parent=5 // pred_region
      %s95 = ssub.s32 %s8, 1
      // Predicated region
      $region13: #{_lambda_.3} parent=11 // pred_check
        %p96 = pneg %p55
      $region14: #{_lambda_.3} parent=11 // pred_check_branch
        %98 = sbr.rel (%p96) target = $region16
      $region15: #{_lambda_.3} parent=11 // pred_region
        _
      $region16: #{_lambda_.3} parent=11 // pred_fallthru
        _
    $region12: #{_lambda_.3} parent=5 // pred_fallthru
      _
    %p99 = scmp.lt.s32.totalorder %s8, 4
    // Predicated region
    $region17: #{_lambda_.3} parent=5 // pred_check
      %p100 = pneg %p99
    $region18: #{_lambda_.3} parent=5 // pred_check_branch
      %102 = sbr.rel (%p100) target = $region20
    $region19: #{_lambda_.3} parent=5 // pred_region
      // Predicated region
      $region21: #{_lambda_.3} parent=19 // pred_check
        %p103 = pneg %p28
      $region22: #{_lambda_.3} parent=19 // pred_check_branch
        %105 = sbr.rel (%p103) target = $region24
      $region23: #{_lambda_.3} parent=19 // pred_region
        %p106 = scmp.lt.s32.totalorder %s8, 3
        %s107 = scalar_select %p106, %s8, 3
        %s108 = smul.addr %s107, 4
        %s109 = scalar_lea.vmem %s0, %s108
      $region24: #{_lambda_.3} parent=19 // pred_fallthru
        _
    $region20: #{_lambda_.3} parent=5 // pred_fallthru
      _
    %p110 = scmp.le.s32.totalorder 1, %s8
    %p111 = scmp.lt.s32.totalorder %s8, 5
    %p112 = pnand %p110, %p111
    %p113 = pneg %p112
    // Predicated region
    $region25: #{_lambda_.3} parent=5 // pred_check
      _
    $region26: #{_lambda_.3} parent=5 // pred_check_branch
      %115 = sbr.rel (%p112) target = $region28
    $region27: #{_lambda_.3} parent=5 // pred_region
      %s116 = ssub.s32 %s8, 1
      %p117 = scmp.lt.s32.totalorder %s13, 3
      %s118 = scalar_select %p117, %s13, 3
      %s119 = smul.addr %s118, 4
      %s120 = scalar_lea.vmem %s0, %s119
      %p121 = pneg %p34
      %p122 = pneg %p31
      %p123 = pneg %p55
      %p124 = pneg %p52
      %p125 = pneg %p81
      %p126 = pneg %p78
      %p127 = scmp.lt.s32.totalorder %s13, 3
      %s128 = scalar_select %p127, %s13, 3
      %s129 = smul.addr %s128, 4
      %s130 = scalar_lea.vmem %s2, %s129
      %p131 = scmp.lt.s32.totalorder %s13, 3
      %s132 = scalar_select %p131, %s13, 3
      %s133 = smul.addr %s132, 4
      %s134 = scalar_lea.vmem %s0, %s133
      %p135 = scmp.lt.s32.totalorder %s13, 3
      %s136 = scalar_select %p135, %s13, 3
      %s137 = smul.addr %s136, 4
      %s138 = scalar_lea.vmem %s2, %s137
      %vm139 = vcmask 652288
      %140 = vst.msk [vmem:[#allocation2] sm:$0x3f] %vm139, 0.0
      %v141 = vld [vmem:[%s134] sm:$0xf]
      %143 = vrot.lane.b32.xlu0 %v141, 8
      %v144 = vpop.permute.xlu0 %143
      %vm146 = vcmask 584768
      %147 = vst.msk [vmem:[#allocation2 + $0x1] sm:$0xf] %vm146, %v144
      %v148 = vld [vmem:[#allocation2] sm:$0xf]
      %vm149 = vcmask 650240
      %150 = vst.msk [vmem:[#allocation3] sm:$0xf] %vm149, %v148
      %v151 = vld [vmem:[#allocation2 + $0x1] sm:$0xf]
      %153 = vrot.lane.b32.xlu0 %v151, 80
      %v154 = vpop.permute.xlu0 %153
      %v155 = vrot.slane %v154, 4
      %vm156 = vcmask 654336
      %v157 = vsel %vm156, %v155, %v154
      %vm159 = vcmask 1044096
      %vm160 = vcmask 261124
      %vm161 = vmor %vm160, %vm159
      %162 = vst.msk [vmem:[#allocation3] sm:$0xff] %vm161, %v157
      %v163 = vld [vmem:[#allocation2 + $0x2] sm:$0xf]
      %165 = vrot.lane.b32.xlu0 %v163, 32
      %v166 = vpop.permute.xlu0 %165
      %vm168 = vcmask 912640
      %169 = vst.msk [vmem:[#allocation3 + $0x4] sm:$0xf] %vm168, %v166
      %v170 = vld [vmem:[#allocation3] sm:$0xff]
      %v171 = vld [vmem:[%s1] sm:$0xff]
      %v172 = vld [vmem:[%s1 + $0x8] sm:$0xff]
      %v173 = vld [vmem:[%s1 + $0x10] sm:$0xff]
      %v174 = vld [vmem:[%s1 + $0x18] sm:$0xff]
      %v175 = vld [vmem:[%s1 + $0x20] sm:$0xff]
      %v176 = vld [vmem:[%s1 + $0x28] sm:$0xff]
      %v177 = vld [vmem:[%s1 + $0x30] sm:$0xff]
      %v178 = vld [vmem:[%s1 + $0x38] sm:$0xff]
      %v179 = vld [vmem:[%s1 + $0x40] sm:$0xff]
      %v180 = vld [vmem:[%s1 + $0x48] sm:$0xff]
      %v181 = vld [vmem:[%s1 + $0x50] sm:$0xff]
      %v182 = vld [vmem:[%s1 + $0x58] sm:$0xff]
      %v183 = vld [vmem:[%s1 + $0x60] sm:$0xff]
      %v184 = vld [vmem:[%s1 + $0x68] sm:$0xff]
      %v185 = vld [vmem:[%s1 + $0x70] sm:$0xff]
      %v186 = vld [vmem:[%s1 + $0x78] sm:$0xff]
      %v187 = vld [vmem:[%s1 + $0x80] sm:$0xff]
      %v188 = vld [vmem:[%s1 + $0x88] sm:$0xff]
      %v189 = vld [vmem:[%s1 + $0x90] sm:$0xff]
      %v190 = vld [vmem:[%s1 + $0x98] sm:$0xff]
      %v191 = vld [vmem:[%s1 + $0xa0] sm:$0xff]
      %v192 = vld [vmem:[%s1 + $0xa8] sm:$0xff]
      %v193 = vld [vmem:[%s1 + $0xb0] sm:$0xff]
      %v194 = vld [vmem:[%s1 + $0xb8] sm:$0xff]
      %v195 = vld [vmem:[%s1 + $0xc0] sm:$0xff]
      %v196 = vld [vmem:[%s1 + $0xc8] sm:$0xff]
      %v197 = vld [vmem:[%s1 + $0xd0] sm:$0xff]
      %v198 = vld [vmem:[%s1 + $0xd8] sm:$0xff]
      %v199 = vld [vmem:[%s1 + $0xe0] sm:$0xff]
      %v200 = vld [vmem:[%s1 + $0xe8] sm:$0xff]
      %v202 = vcombine.high %v170, %v170
      %vm203 = vcmask 916480
      %v204 = vsel %vm203, %v202, 0
      %206 = vmatprep.subr.mxu0 0.0
      %207 = vmatpush1.msra.mxu0 %v171
      %208 = vmatprep.subr.mxu0 0.0
      %209 = vmatpush1.msra.mxu0 %v172
      %210 = vmatprep.subr.mxu0 0.0
      %211 = vmatpush1.msra.mxu0 %v173
      %212 = vmatprep.subr.mxu0 0.0
      %213 = vmatpush1.msra.mxu0 %v174
      %214 = vmatprep.subr.mxu0 0.0
      %215 = vmatpush1.msra.mxu0 %v175
      %216 = vmatprep.subr.mxu0 0.0
      %217 = vmatpush1.msra.mxu0 %v176
      %218 = vmatprep.subr.mxu0 0.0
      %219 = vmatpush1.msra.mxu0 %v177
      %220 = vmatprep.subr.mxu0 0.0
      %221 = vmatpush1.msra.mxu0 %v178
      %222 = vmatprep.subr.mxu0 0.0
      %223 = vmatpush1.msra.mxu0 %v179
      %224 = vmatprep.subr.mxu0 0.0
      %225 = vmatpush1.msra.mxu0 %v180
      %226 = vmatprep.subr.mxu0 0.0
      %227 = vmatpush1.msra.mxu0 %v181
      %228 = vmatprep.subr.mxu0 0.0
      %229 = vmatpush1.msra.mxu0 %v182
      %230 = vmatprep.subr.mxu0 0.0
      %231 = vmatpush1.msra.mxu0 %v183
      %232 = vmatprep.subr.mxu0 0.0
      %233 = vmatpush1.msra.mxu0 %v184
      %234 = vmatprep.subr.mxu0 0.0
      %235 = vmatpush1.msra.mxu0 %v185
      %236 = vmatprep.subr.mxu0 0.0
      %237 = vmatpush1.msra.mxu0 %v186
      %238 = vmatprep.subr.mxu0 0.0
      %239 = vmatpush1.msra.mxu0 %v187
      %240 = vmatprep.subr.mxu0 0.0
      %241 = vmatpush1.msra.mxu0 %v188
      %242 = vmatprep.subr.mxu0 0.0
      %243 = vmatpush1.msra.mxu0 %v189
      %244 = vmatprep.subr.mxu0 0.0
      %245 = vmatpush1.msra.mxu0 %v190
      %246 = vmatprep.subr.mxu0 0.0
      %247 = vmatpush1.msra.mxu0 %v191
      %248 = vmatprep.subr.mxu0 0.0
      %249 = vmatpush1.msra.mxu0 %v192
      %250 = vmatprep.subr.mxu0 0.0
      %251 = vmatpush1.msra.mxu0 %v193
      %252 = vmatprep.subr.mxu0 0.0
      %253 = vmatpush1.msra.mxu0 %v194
      %254 = vmatprep.subr.mxu0 0.0
      %255 = vmatpush1.msra.mxu0 %v195
      %256 = vmatprep.subr.mxu0 0.0
      %257 = vmatpush1.msra.mxu0 %v196
      %258 = vmatprep.subr.mxu0 0.0
      %259 = vmatpush1.msra.mxu0 %v197
      %260 = vmatprep.subr.mxu0 0.0
      %261 = vmatpush1.msra.mxu0 %v198
      %262 = vmatprep.subr.mxu0 0.0
      %263 = vmatpush1.msra.mxu0 %v199
      %264 = vmatprep.subr.mxu0 0.0
      %265 = vmatpush1.msra.mxu0 %v200
      %266 = vmatprep.subr.mxu0 0.0
      %267 = vmatpush1.msra.mxu0 0.0
      %268 = vmatprep.subr.mxu0 0.0
      %269 = vmatpush1.msra.mxu0 0.0
      %270 = vmatprep.mubr.f32.mxu0 %v204
      %271 = vmatmul.mubr.f32.gmra.mrb[0].mxu0 %v170
      %v272 = vpop.f32.mrb[0].mxu0
      %v273 = vadd.f32 0.0, %v272
      %v274 = vpop.f32.mrb[0].mxu0
      %275 = vdwg.mxu0
      %vm276 = vcmp.ge.f32.partialorder %v273, 0.0
      %v277 = vmul.f32 %v273, 0.01
      %v278 = vsel %vm276, %v273, %v277
      %279 = vst [vmem:[%s138] sm:$0xf] %v278
      %p280 = scmp.lt.s32.totalorder %s13, 3
      %s281 = scalar_select %p280, %s13, 3
      %s282 = smul.addr %s281, 4
      %s283 = scalar_lea.vmem %s2, %s282
      // Predicated region
      $region29: #{_lambda_.3} parent=27 // pred_check
        %p284 = pneg %p78
      $region30: #{_lambda_.3} parent=27 // pred_check_branch
        %286 = sbr.rel (%p284) target = $region32
      $region31: #{_lambda_.3} parent=27 // pred_region
        _
      $region32: #{_lambda_.3} parent=27 // pred_fallthru
        _
    $region28: #{_lambda_.3} parent=5 // pred_fallthru
      _
    %p287 = scmp.le.s32.totalorder 2, %s8
    // Predicated region
    $region33: #{_lambda_.3} parent=5 // pred_check
      %p288 = pneg %p287
    $region34: #{_lambda_.3} parent=5 // pred_check_branch
      %290 = sbr.rel (%p288) target = $region36
    $region35: #{_lambda_.3} parent=5 // pred_region
      %s291 = ssub.s32 %s8, 2
      // Predicated region
      $region37: #{_lambda_.3} parent=35 // pred_check
        %p292 = pneg %p84
      $region38: #{_lambda_.3} parent=35 // pred_check_branch
        %294 = sbr.rel (%p292) target = $region40
      $region39: #{_lambda_.3} parent=35 // pred_region
        %p295 = scmp.lt.s32.totalorder %s14, 3
        %s296 = scalar_select %p295, %s14, 3
        %s297 = smul.addr %s296, 4
        %s298 = scalar_lea.vmem %s2, %s297
      $region40: #{_lambda_.3} parent=35 // pred_fallthru
        _
    $region36: #{_lambda_.3} parent=5 // pred_fallthru
      _
  $region6: #{_lambda_.3} parent=0 // loop_footer
    %s12 = sadd.s32 1, %s8
  $region7: #{_lambda_.3} parent=0 // loop_footer_branch
    %7 = sbr.rel target = $region3
  $region8: #{_lambda_.3} parent=0 // loop_exit
    _

</llo_original>
